<compile_context>
chip_gen: v7x
topology: tpu7x:2x2x1
jax: 0.10.0
libtpu: 0.0.40
codegen_flags: <defaults>
</compile_context>

<pallas_src>
import functools

import jax
import jax.numpy as jnp
from jax.experimental import pallas as pl
from jax.experimental.pallas import tpu as pltpu

_MIB = 1024 * 1024


def _zwei_kernel(x_ref, mins_ref, maxs_ref, depths_ref, out_ref):
    """Binary-search encoding, statically unrolled over depth.

    x_ref      : (tb, tf) f32
    mins_ref   : (1, tf)  f32
    maxs_ref   : (1, tf)  f32
    depths_ref : (1, tf)  i32
    out_ref    : (D, tb, tf) i8   (-1 at padding-depth positions)

    Carries a single running midpoint; the data-independent half-width at
    depth d is (maxs - mins) * 2^-(d+2).  With exactly representable ranges
    (e.g. integer mins/maxs) the midpoints are exact and bit-identical to the
    (lows+highs)/2 formulation; in general they agree up to ulps at bisection
    boundaries.
    """
    x = x_ref[...]                                        # (tb, tf)
    mins = mins_ref[...]                                  # (1, tf)
    maxs = maxs_ref[...]                                  # (1, tf)
    depths = depths_ref[...]                              # (1, tf) i32

    mid = jnp.broadcast_to((mins + maxs) * 0.5, x.shape)  # (tb, tf)
    half = (maxs - mins) * 0.25                           # (1, tf), first refinement step

    max_depth = out_ref.shape[0]
    for d in range(max_depth):                            # static unroll (D is small)
        cmp = x >= mid                                    # (tb, tf) bool
        active = d < depths                               # (1, tf) bool
        out_ref[d] = jnp.where(active, cmp.astype(jnp.int8), jnp.int8(-1))
        if d + 1 < max_depth:
            mid = mid + jnp.where(cmp, half, -half)
            half = half * 0.5


def _choose_feature_tile(F):
    """Lane-dense feature tile that divides F, or the full extent (always legal)."""
    if F <= 1024 or F % 128 != 0:
        return F
    for tf in (1024, 512, 256, 128):
        if F % tf == 0:
            return tf
    return F


def _choose_batch_tile(B, f_tile, max_depth, ws_budget):
    """Batch tile: multiple of 32 (int8 sublane packing) that divides B, sized so
    double-buffered I/O plus in-kernel f32 temporaries fit `ws_budget`, and small
    enough to give >=2 'parallel' grid steps (dual-TC on v7x) when B allows."""
    if B < 64:
        return B
    # bytes per batch row in one grid step:
    #   2x double-buffered (x f32 + D int8 tokens) + ~24B of f32/bool temporaries
    per_row = (2 * (4 + max_depth) + 24) * f_tile
    cap = min(max(32, ws_budget // per_row), 2048, B // 2)
    tb = (cap // 32) * 32
    while tb >= 32:                       # multiple of 32 that divides B
        if B % tb == 0:
            return tb
        tb -= 32
    tb = (min(cap, B // 2) // 8) * 8      # fall back to multiples of 8
    while tb >= 8:
        if B % tb == 0:
            return tb
        tb -= 8
    return B                              # no clean divisor: single full-extent block


@functools.partial(jax.jit, static_argnames=("max_depth",))
def zwei_forward(x, feature_ranges, max_depths, *, max_depth):
    """Pallas implementation of Zwei.forward.

    Args:
      x:              (B, F) float32
      feature_ranges: (F, 2) float32  [(min, max), ...]
      max_depths:     (F,)   int32    (must satisfy max(max_depths) <= max_depth)
      max_depth:      int (static)

    Returns:
      tokens of shape (F, B, max_depth), int8, -1 at padding positions.
    """
    B, F = x.shape
    D = int(max_depth)

    x = x.astype(jnp.float32)
    mins = feature_ranges[:, 0].astype(jnp.float32).reshape(1, F)
    maxs = feature_ranges[:, 1].astype(jnp.float32).reshape(1, F)
    depths = max_depths.astype(jnp.int32).reshape(1, F)

    # Per-generation VMEM budget (working set incl. in-kernel temporaries).
    try:
        info = pltpu.get_tpu_info()
        vmem_cap = int(getattr(info, "vmem_capacity_bytes", 0)) or 64 * _MIB
    except Exception:  # pragma: no cover - conservative fallback
        vmem_cap = 64 * _MIB
    ws_budget = min(vmem_cap // 2, 28 * _MIB)

    tf = _choose_feature_tile(F)
    tb = _choose_batch_tile(B, tf, D, ws_budget)
    grid = (B // tb, F // tf)

    est_bytes = (2 * (4 + D) + 24) * tb * tf + 2 * _MIB
    vmem_limit = int(min(max(est_bytes, 32 * _MIB), int(vmem_cap * 0.9)))

    tokens_dbf = pl.pallas_call(
        _zwei_kernel,
        out_shape=jax.ShapeDtypeStruct((D, B, F), jnp.int8),
        grid=grid,
        in_specs=[
            pl.BlockSpec((tb, tf), lambda i, j: (i, j)),
            pl.BlockSpec((1, tf), lambda i, j: (0, j)),
            pl.BlockSpec((1, tf), lambda i, j: (0, j)),
            pl.BlockSpec((1, tf), lambda i, j: (0, j)),
        ],
        out_specs=pl.BlockSpec((D, tb, tf), lambda i, j: (0, i, j)),
        compiler_params=pltpu.CompilerParams(
            dimension_semantics=("parallel", "parallel"),
            vmem_limit_bytes=vmem_limit,
        ),
    )(x, mins, maxs, depths)

    # Single int8 relayout (no widening): (D, B, F) -> (F, B, D).
    return jnp.transpose(tokens_dbf, (2, 1, 0))


def zwei_reference(x, feature_ranges, max_depths, max_depth):
    """Pure-JAX reference mirroring the PyTorch loop (lows/highs formulation)."""
    B, F = x.shape
    lows = jnp.broadcast_to(feature_ranges[:, 0][None, :], (B, F))
    highs = jnp.broadcast_to(feature_ranges[:, 1][None, :], (B, F))
    toks = []
    for d in range(max_depth):
        active = jnp.broadcast_to((d < max_depths)[None, :], (B, F))
        mids = (lows + highs) / 2.0
        decisions = (x >= mids) & active
        toks.append(jnp.where(active, decisions.astype(jnp.int32), -1))
        lows = jnp.where(active & decisions, mids, lows)
        highs = jnp.where(active & (~decisions), mids, highs)
    tokens = jnp.stack(toks, axis=-1)          # (B, F, D)
    return jnp.transpose(tokens, (1, 0, 2))    # (F, B, D)


if __name__ == "__main__":
    key = jax.random.PRNGKey(0)

    def run_case(batch, n_features, max_depths_list, case_key):
        # Integer-valued ranges -> exact bisection midpoints (bit-identical to ref).
        feature_ranges = jnp.stack(
            [jnp.arange(n_features, dtype=jnp.float32) * -1.0 - 1.0,   # mins
             jnp.arange(n_features, dtype=jnp.float32) * 2.0 + 3.0],   # maxs
            axis=1)                                                    # (F, 2)
        max_depths = jnp.asarray(max_depths_list, dtype=jnp.int32)
        max_depth = int(max(max_depths_list))

        u = jax.random.uniform(case_key, (batch, n_features), dtype=jnp.float32)
        x = feature_ranges[:, 0][None, :] + u * (
            feature_ranges[:, 1] - feature_ranges[:, 0])[None, :]

        out = zwei_forward(x, feature_ranges, max_depths, max_depth=max_depth)
        out = jax.block_until_ready(out)

        ref = zwei_reference(x, feature_ranges, max_depths, max_depth)
        assert out.shape == (n_features, batch, max_depth), out.shape
        assert out.dtype == jnp.int8, out.dtype
        assert bool(jnp.array_equal(out.astype(jnp.int32), ref)), \
            "Pallas output mismatch vs reference"

    k1, k2, k3, k4 = jax.random.split(key, 4)
    run_case(4, 8, [3, 4, 5, 6, 2, 6, 4, 3], k1)                       # tiny, unaligned dims
    run_case(10, 5, [2, 6, 3, 6, 4], k2)                               # unaligned dims
    run_case(96, 256, [(i % 6) + 1 for i in range(256)], k3)           # batch-tiled grid
    run_case(64, 2560, [(i % 6) + 1 for i in range(2560)], k4)         # batch x feature grid

    print("KERNEL_OK")
</pallas_src>

<mosaic_0001>
module attributes {stable_mosaic.version = 11 : i64} {
  func.func @_zwei_kernel(%arg0: i32, %arg1: i32, %arg2: memref<4x8xf32, #tpu.memory_space<vmem>>, %arg3: memref<1x8xf32, #tpu.memory_space<vmem>>, %arg4: memref<1x8xf32, #tpu.memory_space<vmem>>, %arg5: memref<1x8xi32, #tpu.memory_space<vmem>>, %arg6: memref<6x4x8xi8, #tpu.memory_space<vmem>>) attributes {dimension_semantics = [#tpu.dimension_semantics<parallel>, #tpu.dimension_semantics<parallel>], iteration_bounds = array<i64: 1, 1>, scalar_prefetch = 0 : i64, scratch_operands = 0 : i64, tpu.core_type = #tpu.core_type<tc>, window_params = [{transform_indices = @transform_0, window_bounds = array<i64: 4, 8>}, {transform_indices = @transform_1, window_bounds = array<i64: 1, 8>}, {transform_indices = @transform_2, window_bounds = array<i64: 1, 8>}, {transform_indices = @transform_3, window_bounds = array<i64: 1, 8>}, {transform_indices = @transform_4, window_bounds = array<i64: 6, 4, 8>}]} {
    %c0 = arith.constant 0 : index
    %c0_0 = arith.constant 0 : index
    %0 = vector.load %arg2[%c0, %c0_0] : memref<4x8xf32, #tpu.memory_space<vmem>>, vector<4x8xf32>
    %c0_1 = arith.constant 0 : index
    %c0_2 = arith.constant 0 : index
    %1 = vector.load %arg3[%c0_1, %c0_2] : memref<1x8xf32, #tpu.memory_space<vmem>>, vector<1x8xf32>
    %c0_3 = arith.constant 0 : index
    %c0_4 = arith.constant 0 : index
    %2 = vector.load %arg4[%c0_3, %c0_4] : memref<1x8xf32, #tpu.memory_space<vmem>>, vector<1x8xf32>
    %c0_5 = arith.constant 0 : index
    %c0_6 = arith.constant 0 : index
    %3 = vector.load %arg5[%c0_5, %c0_6] : memref<1x8xi32, #tpu.memory_space<vmem>>, vector<1x8xi32>
    %4 = arith.addf %1, %2 : vector<1x8xf32>
    %cst = arith.constant 5.000000e-01 : f32
    %5 = vector.broadcast %cst : f32 to vector<1x8xf32>
    %6 = arith.mulf %4, %5 : vector<1x8xf32>
    %7 = vector.shape_cast %6 : vector<1x8xf32> to vector<1x8xf32>
    %8 = vector.broadcast %7 : vector<1x8xf32> to vector<4x8xf32>
    %9 = arith.subf %2, %1 : vector<1x8xf32>
    %cst_7 = arith.constant 2.500000e-01 : f32
    %10 = vector.broadcast %cst_7 : f32 to vector<1x8xf32>
    %11 = arith.mulf %9, %10 : vector<1x8xf32>
    %12 = arith.cmpf oge, %0, %8 : vector<4x8xf32>
    %c0_i32 = arith.constant 0 : i32
    %13 = vector.broadcast %c0_i32 : i32 to vector<1x8xi32>
    %14 = arith.cmpi sgt, %3, %13 : vector<1x8xi32>
    %15 = arith.extui %12 : vector<4x8xi1> to vector<4x8xi8>
    %c-1_i8 = arith.constant -1 : i8
    %16 = vector.shape_cast %14 : vector<1x8xi1> to vector<1x8xi1>
    %17 = vector.broadcast %16 : vector<1x8xi1> to vector<4x8xi1>
    %18 = vector.broadcast %c-1_i8 : i8 to vector<4x8xi8>
    %19 = arith.select %17, %15, %18 : vector<4x8xi1>, vector<4x8xi8>
    %c0_8 = arith.constant 0 : index
    %c0_9 = arith.constant 0 : index
    %c0_10 = arith.constant 0 : index
    %20 = vector.load %arg6[%c0_8, %c0_9, %c0_10] : memref<6x4x8xi8, #tpu.memory_space<vmem>>, vector<1x4x8xi8>
    %21 = vector.shape_cast %20 : vector<1x4x8xi8> to vector<4x8xi8>
    %22 = vector.shape_cast %19 : vector<4x8xi8> to vector<1x4x8xi8>
    tpu.vector_store %arg6[%c0_8, %c0_9, %c0_10], %22 {strides = array<i32>} : memref<6x4x8xi8, #tpu.memory_space<vmem>>, vector<1x4x8xi8>,
    %cst_11 = arith.constant 0.000000e+00 : f32
    %23 = vector.broadcast %cst_11 : f32 to vector<1x8xf32>
    %24 = arith.subf %23, %11 : vector<1x8xf32>
    %25 = vector.shape_cast %11 : vector<1x8xf32> to vector<1x8xf32>
    %26 = vector.broadcast %25 : vector<1x8xf32> to vector<4x8xf32>
    %27 = vector.shape_cast %24 : vector<1x8xf32> to vector<1x8xf32>
    %28 = vector.broadcast %27 : vector<1x8xf32> to vector<4x8xf32>
    %29 = arith.select %12, %26, %28 : vector<4x8xi1>, vector<4x8xf32>
    %30 = arith.addf %8, %29 : vector<4x8xf32>
    %cst_12 = arith.constant 5.000000e-01 : f32
    %31 = vector.broadcast %cst_12 : f32 to vector<1x8xf32>
    %32 = arith.mulf %11, %31 : vector<1x8xf32>
    %33 = arith.cmpf oge, %0, %30 : vector<4x8xf32>
    %c1_i32 = arith.constant 1 : i32
    %34 = vector.broadcast %c1_i32 : i32 to vector<1x8xi32>
    %35 = arith.cmpi sgt, %3, %34 : vector<1x8xi32>
    %36 = arith.extui %33 : vector<4x8xi1> to vector<4x8xi8>
    %c-1_i8_13 = arith.constant -1 : i8
    %37 = vector.shape_cast %35 : vector<1x8xi1> to vector<1x8xi1>
    %38 = vector.broadcast %37 : vector<1x8xi1> to vector<4x8xi1>
    %39 = vector.broadcast %c-1_i8_13 : i8 to vector<4x8xi8>
    %40 = arith.select %38, %36, %39 : vector<4x8xi1>, vector<4x8xi8>
    %c1 = arith.constant 1 : index
    %c0_14 = arith.constant 0 : index
    %c0_15 = arith.constant 0 : index
    %41 = vector.load %arg6[%c1, %c0_14, %c0_15] : memref<6x4x8xi8, #tpu.memory_space<vmem>>, vector<1x4x8xi8>
    %42 = vector.shape_cast %41 : vector<1x4x8xi8> to vector<4x8xi8>
    %43 = vector.shape_cast %40 : vector<4x8xi8> to vector<1x4x8xi8>
    tpu.vector_store %arg6[%c1, %c0_14, %c0_15], %43 {strides = array<i32>} : memref<6x4x8xi8, #tpu.memory_space<vmem>>, vector<1x4x8xi8>,
    %cst_16 = arith.constant 0.000000e+00 : f32
    %44 = vector.broadcast %cst_16 : f32 to vector<1x8xf32>
    %45 = arith.subf %44, %32 : vector<1x8xf32>
    %46 = vector.shape_cast %32 : vector<1x8xf32> to vector<1x8xf32>
    %47 = vector.broadcast %46 : vector<1x8xf32> to vector<4x8xf32>
    %48 = vector.shape_cast %45 : vector<1x8xf32> to vector<1x8xf32>
    %49 = vector.broadcast %48 : vector<1x8xf32> to vector<4x8xf32>
    %50 = arith.select %33, %47, %49 : vector<4x8xi1>, vector<4x8xf32>
    %51 = arith.addf %30, %50 : vector<4x8xf32>
    %cst_17 = arith.constant 5.000000e-01 : f32
    %52 = vector.broadcast %cst_17 : f32 to vector<1x8xf32>
    %53 = arith.mulf %32, %52 : vector<1x8xf32>
    %54 = arith.cmpf oge, %0, %51 : vector<4x8xf32>
    %c2_i32 = arith.constant 2 : i32
    %55 = vector.broadcast %c2_i32 : i32 to vector<1x8xi32>
    %56 = arith.cmpi sgt, %3, %55 : vector<1x8xi32>
    %57 = arith.extui %54 : vector<4x8xi1> to vector<4x8xi8>
    %c-1_i8_18 = arith.constant -1 : i8
    %58 = vector.shape_cast %56 : vector<1x8xi1> to vector<1x8xi1>
    %59 = vector.broadcast %58 : vector<1x8xi1> to vector<4x8xi1>
    %60 = vector.broadcast %c-1_i8_18 : i8 to vector<4x8xi8>
    %61 = arith.select %59, %57, %60 : vector<4x8xi1>, vector<4x8xi8>
    %c2 = arith.constant 2 : index
    %c0_19 = arith.constant 0 : index
    %c0_20 = arith.constant 0 : index
    %62 = vector.load %arg6[%c2, %c0_19, %c0_20] : memref<6x4x8xi8, #tpu.memory_space<vmem>>, vector<1x4x8xi8>
    %63 = vector.shape_cast %62 : vector<1x4x8xi8> to vector<4x8xi8>
    %64 = vector.shape_cast %61 : vector<4x8xi8> to vector<1x4x8xi8>
    tpu.vector_store %arg6[%c2, %c0_19, %c0_20], %64 {strides = array<i32>} : memref<6x4x8xi8, #tpu.memory_space<vmem>>, vector<1x4x8xi8>,
    %cst_21 = arith.constant 0.000000e+00 : f32
    %65 = vector.broadcast %cst_21 : f32 to vector<1x8xf32>
    %66 = arith.subf %65, %53 : vector<1x8xf32>
    %67 = vector.shape_cast %53 : vector<1x8xf32> to vector<1x8xf32>
    %68 = vector.broadcast %67 : vector<1x8xf32> to vector<4x8xf32>
    %69 = vector.shape_cast %66 : vector<1x8xf32> to vector<1x8xf32>
    %70 = vector.broadcast %69 : vector<1x8xf32> to vector<4x8xf32>
    %71 = arith.select %54, %68, %70 : vector<4x8xi1>, vector<4x8xf32>
    %72 = arith.addf %51, %71 : vector<4x8xf32>
    %cst_22 = arith.constant 5.000000e-01 : f32
    %73 = vector.broadcast %cst_22 : f32 to vector<1x8xf32>
    %74 = arith.mulf %53, %73 : vector<1x8xf32>
    %75 = arith.cmpf oge, %0, %72 : vector<4x8xf32>
    %c3_i32 = arith.constant 3 : i32
    %76 = vector.broadcast %c3_i32 : i32 to vector<1x8xi32>
    %77 = arith.cmpi sgt, %3, %76 : vector<1x8xi32>
    %78 = arith.extui %75 : vector<4x8xi1> to vector<4x8xi8>
    %c-1_i8_23 = arith.constant -1 : i8
    %79 = vector.shape_cast %77 : vector<1x8xi1> to vector<1x8xi1>
    %80 = vector.broadcast %79 : vector<1x8xi1> to vector<4x8xi1>
    %81 = vector.broadcast %c-1_i8_23 : i8 to vector<4x8xi8>
    %82 = arith.select %80, %78, %81 : vector<4x8xi1>, vector<4x8xi8>
    %c3 = arith.constant 3 : index
    %c0_24 = arith.constant 0 : index
    %c0_25 = arith.constant 0 : index
    %83 = vector.load %arg6[%c3, %c0_24, %c0_25] : memref<6x4x8xi8, #tpu.memory_space<vmem>>, vector<1x4x8xi8>
    %84 = vector.shape_cast %83 : vector<1x4x8xi8> to vector<4x8xi8>
    %85 = vector.shape_cast %82 : vector<4x8xi8> to vector<1x4x8xi8>
    tpu.vector_store %arg6[%c3, %c0_24, %c0_25], %85 {strides = array<i32>} : memref<6x4x8xi8, #tpu.memory_space<vmem>>, vector<1x4x8xi8>,
    %cst_26 = arith.constant 0.000000e+00 : f32
    %86 = vector.broadcast %cst_26 : f32 to vector<1x8xf32>
    %87 = arith.subf %86, %74 : vector<1x8xf32>
    %88 = vector.shape_cast %74 : vector<1x8xf32> to vector<1x8xf32>
    %89 = vector.broadcast %88 : vector<1x8xf32> to vector<4x8xf32>
    %90 = vector.shape_cast %87 : vector<1x8xf32> to vector<1x8xf32>
    %91 = vector.broadcast %90 : vector<1x8xf32> to vector<4x8xf32>
    %92 = arith.select %75, %89, %91 : vector<4x8xi1>, vector<4x8xf32>
    %93 = arith.addf %72, %92 : vector<4x8xf32>
    %cst_27 = arith.constant 5.000000e-01 : f32
    %94 = vector.broadcast %cst_27 : f32 to vector<1x8xf32>
    %95 = arith.mulf %74, %94 : vector<1x8xf32>
    %96 = arith.cmpf oge, %0, %93 : vector<4x8xf32>
    %c4_i32 = arith.constant 4 : i32
    %97 = vector.broadcast %c4_i32 : i32 to vector<1x8xi32>
    %98 = arith.cmpi sgt, %3, %97 : vector<1x8xi32>
    %99 = arith.extui %96 : vector<4x8xi1> to vector<4x8xi8>
    %c-1_i8_28 = arith.constant -1 : i8
    %100 = vector.shape_cast %98 : vector<1x8xi1> to vector<1x8xi1>
    %101 = vector.broadcast %100 : vector<1x8xi1> to vector<4x8xi1>
    %102 = vector.broadcast %c-1_i8_28 : i8 to vector<4x8xi8>
    %103 = arith.select %101, %99, %102 : vector<4x8xi1>, vector<4x8xi8>
    %c4 = arith.constant 4 : index
    %c0_29 = arith.constant 0 : index
    %c0_30 = arith.constant 0 : index
    %104 = vector.load %arg6[%c4, %c0_29, %c0_30] : memref<6x4x8xi8, #tpu.memory_space<vmem>>, vector<1x4x8xi8>
    %105 = vector.shape_cast %104 : vector<1x4x8xi8> to vector<4x8xi8>
    %106 = vector.shape_cast %103 : vector<4x8xi8> to vector<1x4x8xi8>
    tpu.vector_store %arg6[%c4, %c0_29, %c0_30], %106 {strides = array<i32>} : memref<6x4x8xi8, #tpu.memory_space<vmem>>, vector<1x4x8xi8>,
    %cst_31 = arith.constant 0.000000e+00 : f32
    %107 = vector.broadcast %cst_31 : f32 to vector<1x8xf32>
    %108 = arith.subf %107, %95 : vector<1x8xf32>
    %109 = vector.shape_cast %95 : vector<1x8xf32> to vector<1x8xf32>
    %110 = vector.broadcast %109 : vector<1x8xf32> to vector<4x8xf32>
    %111 = vector.shape_cast %108 : vector<1x8xf32> to vector<1x8xf32>
    %112 = vector.broadcast %111 : vector<1x8xf32> to vector<4x8xf32>
    %113 = arith.select %96, %110, %112 : vector<4x8xi1>, vector<4x8xf32>
    %114 = arith.addf %93, %113 : vector<4x8xf32>
    %115 = arith.cmpf oge, %0, %114 : vector<4x8xf32>
    %c5_i32 = arith.constant 5 : i32
    %116 = vector.broadcast %c5_i32 : i32 to vector<1x8xi32>
    %117 = arith.cmpi sgt, %3, %116 : vector<1x8xi32>
    %118 = arith.extui %115 : vector<4x8xi1> to vector<4x8xi8>
    %c-1_i8_32 = arith.constant -1 : i8
    %119 = vector.shape_cast %117 : vector<1x8xi1> to vector<1x8xi1>
    %120 = vector.broadcast %119 : vector<1x8xi1> to vector<4x8xi1>
    %121 = vector.broadcast %c-1_i8_32 : i8 to vector<4x8xi8>
    %122 = arith.select %120, %118, %121 : vector<4x8xi1>, vector<4x8xi8>
    %c5 = arith.constant 5 : index
    %c0_33 = arith.constant 0 : index
    %c0_34 = arith.constant 0 : index
    %123 = vector.load %arg6[%c5, %c0_33, %c0_34] : memref<6x4x8xi8, #tpu.memory_space<vmem>>, vector<1x4x8xi8>
    %124 = vector.shape_cast %123 : vector<1x4x8xi8> to vector<4x8xi8>
    %125 = vector.shape_cast %122 : vector<4x8xi8> to vector<1x4x8xi8>
    tpu.vector_store %arg6[%c5, %c0_33, %c0_34], %125 {strides = array<i32>} : memref<6x4x8xi8, #tpu.memory_space<vmem>>, vector<1x4x8xi8>,
    return
  }
  func.func @transform_0(%arg0: i32, %arg1: i32) -> (i32, i32) {
    %c0_i32 = arith.constant 0 : i32
    return %arg0, %arg1 : i32, i32
  }
  func.func @transform_1(%arg0: i32, %arg1: i32) -> (i32, i32) {
    %c0_i32 = arith.constant 0 : i32
    %c0_i32_0 = arith.constant 0 : i32
    return %c0_i32, %arg1 : i32, i32
  }
  func.func @transform_2(%arg0: i32, %arg1: i32) -> (i32, i32) {
    %c0_i32 = arith.constant 0 : i32
    %c0_i32_0 = arith.constant 0 : i32
    return %c0_i32, %arg1 : i32, i32
  }
  func.func @transform_3(%arg0: i32, %arg1: i32) -> (i32, i32) {
    %c0_i32 = arith.constant 0 : i32
    %c0_i32_0 = arith.constant 0 : i32
    return %c0_i32, %arg1 : i32, i32
  }
  func.func @transform_4(%arg0: i32, %arg1: i32) -> (i32, i32, i32) {
    %c0_i32 = arith.constant 0 : i32
    %c0_i32_0 = arith.constant 0 : i32
    return %c0_i32, %arg0, %arg1 : i32, i32, i32
  }
}

</mosaic_0001>

<llo_original>
// kernel: zwei_forward.1
$region0: #{zwei_forward.1}
  #allocation0 [shape = 'u32[]', space=smem, size = 0x4, offset = 0x4, fixed_abs, tag = 'smem constant byte address 0x4 - core index']
  #allocation1 [shape = 'u32[144,128]{1,0:T(1,128)}', space=vmem, size = 0x12000, scoped, tag = 'internal scratch']
  %s0 = inlined_call_operand.vmem [shape: f32[4,8], index: 0, kind: input, shape index: {}]
  %s1 = inlined_call_operand.vmem [shape: f32[1,8], index: 1, kind: input, shape index: {}]
  %s2 = inlined_call_operand.vmem [shape: f32[1,8], index: 2, kind: input, shape index: {}]
  %s3 = inlined_call_operand.vmem [shape: s32[1,8], index: 3, kind: input, shape index: {}]
  %s4 = inlined_call_operand.hbm [shape: s8[6,4,8], index: 4, kind: output, shape index: {}]
  %s5 = sld [smem:[#allocation0]]
  $region26: #{zwei_forward.1} parent=0
    _
  %s7 = ssub.s32 1, %s5
  %s8 = scalar_select 0, %s7, %s5
  $region1: #{zwei_forward.1} parent=0
    #allocation2 [shape = 'u8[3072]{0}', space=vmem, size = 0xc00, scoped, tag = 'output window, operand 0, single buffered']
    #allocation3 [shape = 's32[1]{0}', space=sflag, size = 0x4, scoped, tag = 'scoped memory for zwei_forward.1']
    %9 = vsyncpa [#allocation3], 0
    // Predicated region
    $region2: #{zwei_forward.1} parent=1 // pred_check
      _
    $region3: #{zwei_forward.1} parent=1 // pred_check_branch
      %11 = sbr.rel (0) target = $region5
    $region4: #{zwei_forward.1} parent=1 // pred_region
      _
    $region5: #{zwei_forward.1} parent=1 // pred_fallthru
      _
    // Predicated region
    $region6: #{zwei_forward.1} parent=1 // pred_check
      _
    $region7: #{zwei_forward.1} parent=1 // pred_check_branch
      %13 = sbr.rel (0) target = $region9
    $region8: #{zwei_forward.1} parent=1 // pred_region
      _
    $region9: #{zwei_forward.1} parent=1 // pred_fallthru
      _
    // Predicated region
    $region10: #{zwei_forward.1} parent=1 // pred_check
      _
    $region11: #{zwei_forward.1} parent=1 // pred_check_branch
      %15 = sbr.rel (0) target = $region13
    $region12: #{zwei_forward.1} parent=1 // pred_region
      _
    $region13: #{zwei_forward.1} parent=1 // pred_fallthru
      _
    // Predicated region
    $region14: #{zwei_forward.1} parent=1 // pred_check
      _
    $region15: #{zwei_forward.1} parent=1 // pred_check_branch
      %17 = sbr.rel (0) target = $region17
    $region16: #{zwei_forward.1} parent=1 // pred_region
      _
    $region17: #{zwei_forward.1} parent=1 // pred_fallthru
      _
    %v21 = vld [vmem:[%s0] sm:$0xf]
    %v22 = vld [vmem:[%s1] sm:$0x1]
    %v23 = vld [vmem:[%s2] sm:$0x1]
    %v24 = vld [vmem:[%s3] sm:$0x1]
    %v25 = vadd.f32 %v22, %v23
    %v26 = vmul.f32 %v25, 0.5
    %v28 = vlaneseq
    %v29 = vshrl.u32 %v28, 7
    %v30 = vsub.s32 0, %v29
    %v31 = vrot.slane %v26, %v30
    %v33 = vsub.f32 %v23, %v22
    %v34 = vmul.f32 %v33, 0.25
    %vm35 = vcmp.ge.f32.partialorder %v21, %v31
    %vm36 = vcmp.gt.s32.totalorder %v24, 0
    %vm37 = vmpackc.low %vm35, %vm35
    %vm38 = vmpackc.even %vm37, %vm37
    %v39 = vsel %vm38, 16843009, 0
    %v40 = vsel %vm36, 1, 0
    %v41 = vlaneseq
    %v42 = vshrl.u32 %v41, 7
    %v43 = vsub.s32 0, %v42
    %v44 = vrot.slane %v40, %v43
    %vm45 = vcmp.eq.s32.totalorder %v44, 1
    %vm46 = vmpackc.low %vm45, %vm45
    %vm47 = vmpackc.even %vm46, %vm46
    %v48 = vsel %vm47, %v39, 4294967295
    %vm49 = vcmask 57344
    %50 = vst.msk [vmem:[#allocation2] sm:$0x1] %vm49, %v48
    %v51 = vsub.f32 0.0, %v34
    %v53 = vlaneseq
    %v54 = vshrl.u32 %v53, 7
    %v55 = vsub.s32 0, %v54
    %v56 = vrot.slane %v34, %v55
    %v59 = vlaneseq
    %v60 = vshrl.u32 %v59, 7
    %v61 = vsub.s32 0, %v60
    %v62 = vrot.slane %v51, %v61
    %v64 = vsel %vm35, %v56, %v62
    %v65 = vadd.f32 %v31, %v64
    %v66 = vmul.f32 %v34, 0.5
    %vm67 = vcmp.ge.f32.partialorder %v21, %v65
    %vm68 = vcmp.gt.s32.totalorder %v24, 1
    %vm69 = vmpackc.low %vm67, %vm67
    %vm70 = vmpackc.even %vm69, %vm69
    %v71 = vsel %vm70, 16843009, 0
    %v72 = vsel %vm68, 1, 0
    %v73 = vlaneseq
    %v74 = vshrl.u32 %v73, 7
    %v75 = vsub.s32 0, %v74
    %v76 = vrot.slane %v72, %v75
    %vm77 = vcmp.eq.s32.totalorder %v76, 1
    %vm78 = vmpackc.low %vm77, %vm77
    %vm79 = vmpackc.even %vm78, %vm78
    %v80 = vsel %vm79, %v71, 4294967295
    %s81 = scalar_lea.vmem [#allocation2], 1
    %82 = vst.msk [vmem:[%s81] sm:$0x1] %vm49, %v80
    %v83 = vsub.f32 0.0, %v66
    %v85 = vlaneseq
    %v86 = vshrl.u32 %v85, 7
    %v87 = vsub.s32 0, %v86
    %v88 = vrot.slane %v66, %v87
    %v91 = vlaneseq
    %v92 = vshrl.u32 %v91, 7
    %v93 = vsub.s32 0, %v92
    %v94 = vrot.slane %v83, %v93
    %v96 = vsel %vm67, %v88, %v94
    %v97 = vadd.f32 %v65, %v96
    %v98 = vmul.f32 %v66, 0.5
    %vm99 = vcmp.ge.f32.partialorder %v21, %v97
    %vm100 = vcmp.gt.s32.totalorder %v24, 2
    %vm101 = vmpackc.low %vm99, %vm99
    %vm102 = vmpackc.even %vm101, %vm101
    %v103 = vsel %vm102, 16843009, 0
    %v104 = vsel %vm100, 1, 0
    %v105 = vlaneseq
    %v106 = vshrl.u32 %v105, 7
    %v107 = vsub.s32 0, %v106
    %v108 = vrot.slane %v104, %v107
    %vm109 = vcmp.eq.s32.totalorder %v108, 1
    %vm110 = vmpackc.low %vm109, %vm109
    %vm111 = vmpackc.even %vm110, %vm110
    %v112 = vsel %vm111, %v103, 4294967295
    %s113 = scalar_lea.vmem [#allocation2], 2
    %114 = vst.msk [vmem:[%s113] sm:$0x1] %vm49, %v112
    %v115 = vsub.f32 0.0, %v98
    %v117 = vlaneseq
    %v118 = vshrl.u32 %v117, 7
    %v119 = vsub.s32 0, %v118
    %v120 = vrot.slane %v98, %v119
    %v123 = vlaneseq
    %v124 = vshrl.u32 %v123, 7
    %v125 = vsub.s32 0, %v124
    %v126 = vrot.slane %v115, %v125
    %v128 = vsel %vm99, %v120, %v126
    %v129 = vadd.f32 %v97, %v128
    %v130 = vmul.f32 %v98, 0.5
    %vm131 = vcmp.ge.f32.partialorder %v21, %v129
    %vm132 = vcmp.gt.s32.totalorder %v24, 3
    %vm133 = vmpackc.low %vm131, %vm131
    %vm134 = vmpackc.even %vm133, %vm133
    %v135 = vsel %vm134, 16843009, 0
    %v136 = vsel %vm132, 1, 0
    %v137 = vlaneseq
    %v138 = vshrl.u32 %v137, 7
    %v139 = vsub.s32 0, %v138
    %v140 = vrot.slane %v136, %v139
    %vm141 = vcmp.eq.s32.totalorder %v140, 1
    %vm142 = vmpackc.low %vm141, %vm141
    %vm143 = vmpackc.even %vm142, %vm142
    %v144 = vsel %vm143, %v135, 4294967295
    %s145 = scalar_lea.vmem [#allocation2], 3
    %146 = vst.msk [vmem:[%s145] sm:$0x1] %vm49, %v144
    %v147 = vsub.f32 0.0, %v130
    %v149 = vlaneseq
    %v150 = vshrl.u32 %v149, 7
    %v151 = vsub.s32 0, %v150
    %v152 = vrot.slane %v130, %v151
    %v155 = vlaneseq
    %v156 = vshrl.u32 %v155, 7
    %v157 = vsub.s32 0, %v156
    %v158 = vrot.slane %v147, %v157
    %v160 = vsel %vm131, %v152, %v158
    %v161 = vadd.f32 %v129, %v160
    %v162 = vmul.f32 %v130, 0.5
    %vm163 = vcmp.ge.f32.partialorder %v21, %v161
    %vm164 = vcmp.gt.s32.totalorder %v24, 4
    %vm165 = vmpackc.low %vm163, %vm163
    %vm166 = vmpackc.even %vm165, %vm165
    %v167 = vsel %vm166, 16843009, 0
    %v168 = vsel %vm164, 1, 0
    %v169 = vlaneseq
    %v170 = vshrl.u32 %v169, 7
    %v171 = vsub.s32 0, %v170
    %v172 = vrot.slane %v168, %v171
    %vm173 = vcmp.eq.s32.totalorder %v172, 1
    %vm174 = vmpackc.low %vm173, %vm173
    %vm175 = vmpackc.even %vm174, %vm174
    %v176 = vsel %vm175, %v167, 4294967295
    %s177 = scalar_lea.vmem [#allocation2], 4
    %178 = vst.msk [vmem:[%s177] sm:$0x1] %vm49, %v176
    %v179 = vsub.f32 0.0, %v162
    %v181 = vlaneseq
    %v182 = vshrl.u32 %v181, 7
    %v183 = vsub.s32 0, %v182
    %v184 = vrot.slane %v162, %v183
    %v187 = vlaneseq
    %v188 = vshrl.u32 %v187, 7
    %v189 = vsub.s32 0, %v188
    %v190 = vrot.slane %v179, %v189
    %v192 = vsel %vm163, %v184, %v190
    %v193 = vadd.f32 %v161, %v192
    %vm194 = vcmp.ge.f32.partialorder %v21, %v193
    %vm195 = vcmp.gt.s32.totalorder %v24, 5
    %vm196 = vmpackc.low %vm194, %vm194
    %vm197 = vmpackc.even %vm196, %vm196
    %v198 = vsel %vm197, 16843009, 0
    %v199 = vsel %vm195, 1, 0
    %v200 = vlaneseq
    %v201 = vshrl.u32 %v200, 7
    %v202 = vsub.s32 0, %v201
    %v203 = vrot.slane %v199, %v202
    %vm204 = vcmp.eq.s32.totalorder %v203, 1
    %vm205 = vmpackc.low %vm204, %vm204
    %vm206 = vmpackc.even %vm205, %vm205
    %v207 = vsel %vm206, %v198, 4294967295
    %s208 = scalar_lea.vmem [#allocation2], 5
    %209 = vst.msk [vmem:[%s208] sm:$0x1] %vm49, %v207
    // Predicated region
    $region18: #{zwei_forward.1} parent=1 // pred_check
      _
    $region19: #{zwei_forward.1} parent=1 // pred_check_branch
      %211 = sbr.rel (0) target = $region21
    $region20: #{zwei_forward.1} parent=1 // pred_region
      %s213 = ssub.s32 96, 96
      %214 = vsyncadd [#allocation3], %s213
      %s215 = sshll.u32 [#allocation2], 4
      %s216 = int_to_ptr.vmem [resolvable:$true] %s215
      %221 = dma.vmem_to_hbm [thread:$0]  %s216, 96, %s4, [#allocation3], 16, 16, 1
    $region21: #{zwei_forward.1} parent=1 // pred_fallthru
      _
    // Predicated region
    $region22: #{zwei_forward.1} parent=1 // pred_check
      _
    $region23: #{zwei_forward.1} parent=1 // pred_check_branch
      %223 = sbr.rel (0) target = $region25
    $region24: #{zwei_forward.1} parent=1 // pred_region
      %224 = dma.done [#allocation3], 96
    $region25: #{zwei_forward.1} parent=1 // pred_fallthru
      _
    %225 = vsyncpa [#allocation3], 1

</llo_original>
